<compile_context>
chip_gen: v7x
topology: tpu7x:2x2x1
jax: 0.10.0
libtpu: 0.0.40
codegen_flags: <defaults>
</compile_context>

<pallas_src>
import numpy as np
import jax
import jax.numpy as jnp
from jax.experimental import pallas as pl
from jax.experimental.pallas import tpu as pltpu


def len_of_split_into_k_parts(L, k):
    if k <= 0:
        raise ValueError('k must be greater than 0')
    if L < k:
        raise ValueError('The iterable has fewer elements than k')
    avg = L // k
    remainder = L % k
    return [avg + (1 if i < remainder else 0) for i in range(k)]


def _fused_splitters_kernel(x_ref, w_ref, b_ref, o_ref):
    """One MXU matmul + fused bias, one dense store.

    x_ref: [TN, T]   row tile of flattened (B*C) series
    w_ref: [T,  M]   block-structured fused weight (M = Ttok*D, lane-padded)
    b_ref: [1,  M]   fused bias
    o_ref: [TN, M]   all tokens of all resolutions for this row tile
    """
    acc = jnp.dot(x_ref[...], w_ref[...], preferred_element_type=jnp.float32)
    o_ref[...] = (acc + b_ref[...]).astype(o_ref.dtype)


def _pick_row_tile(N, T, M, dtype_bytes=4, budget_bytes=24 << 20):
    """Largest 8-aligned row tile whose double-buffered blocks fit the budget.

    Per-step VMEM ~= 2*TN*T (x, double-buffered) + T*M (resident weight)
                     + M (bias) + 2*TN*M (out, double-buffered), all * 4B.
    Big tiles amortize the ~0.35us per-grid-step overhead.
    """
    if N <= 8:
        return N
    fixed = (T * M + M) * dtype_bytes
    per_row = 2 * (T + M) * dtype_bytes
    avail = max(budget_bytes - fixed, per_row * 8)
    tn = max(8, min(N, avail // per_row, 1024))
    return int((tn // 8) * 8)


def fused_splitters(x_flat, w_big, b_big):
    """x_flat: [N, T] -> [N, M] with M = w_big.shape[1]."""
    N, T = x_flat.shape
    M = w_big.shape[1]
    TN = N if N <= 8 else _pick_row_tile(N, T, M)
    grid = (pl.cdiv(N, TN),)
    return pl.pallas_call(
        _fused_splitters_kernel,
        out_shape=jax.ShapeDtypeStruct((N, M), x_flat.dtype),
        grid_spec=pltpu.PrefetchScalarGridSpec(
            num_scalar_prefetch=0,
            grid=grid,
            in_specs=[
                pl.BlockSpec((TN, T), lambda i: (i, 0)),
                pl.BlockSpec((T, M), lambda i: (0, 0)),   # resident across rows
                pl.BlockSpec((1, M), lambda i: (0, 0)),
            ],
            out_specs=pl.BlockSpec((TN, M), lambda i: (i, 0)),
        ),
        compiler_params=pltpu.CompilerParams(
            # Row axis is parallel -> shards across v7x's 2 TensorCores.
            dimension_semantics=("parallel",),
            vmem_limit_bytes=64 << 20),
    )(x_flat, w_big, b_big)


class ManySplittersPallas:
    """JAX/Pallas port of ManySplitters (forward only)."""

    def __init__(self, d_model, lookback_horizon, partitions, shared=True, *, key):
        self.d_model = int(d_model)
        self.lookback_horizon = int(lookback_horizon)
        self.partitions = [int(p) for p in partitions]
        self.shared = bool(shared)
        self.total_tokens = int(sum(self.partitions))

        # Per-resolution nn.Linear parameters, stored in (in, out) layout with
        # nn.Linear-style uniform(-1/sqrt(fan_in), 1/sqrt(fan_in)) init.
        self.split_lengths = []   # per resolution: chunk lengths
        self.weights = []         # shared: [max_len, D]; else: list of [l, D]
        self.biases = []          # shared: [D];          else: list of [D]
        for i, k in enumerate(self.partitions):
            lengths = len_of_split_into_k_parts(self.lookback_horizon, k)
            self.split_lengths.append(lengths)
            rk = jax.random.fold_in(key, i)
            if self.shared:
                fan_in = int(np.max(lengths))
                bound = 1.0 / float(np.sqrt(fan_in))
                kw, kb = jax.random.split(rk)
                self.weights.append(jax.random.uniform(
                    kw, (fan_in, self.d_model), jnp.float32, -bound, bound))
                self.biases.append(jax.random.uniform(
                    kb, (self.d_model,), jnp.float32, -bound, bound))
            else:
                ws, bs = [], []
                for s, l in enumerate(lengths):
                    bound = 1.0 / float(np.sqrt(l))
                    kw, kb = jax.random.split(jax.random.fold_in(rk, s))
                    ws.append(jax.random.uniform(
                        kw, (l, self.d_model), jnp.float32, -bound, bound))
                    bs.append(jax.random.uniform(
                        kb, (self.d_model,), jnp.float32, -bound, bound))
                self.weights.append(ws)
                self.biases.append(bs)

        # Fold every resolution / split (including the left zero-padding of
        # shared weights) into one block-structured weight + bias so the kernel
        # is a single matmul with a lane-dense output.
        M = self.total_tokens * self.d_model
        self.out_cols = M
        M_pad = max(M, 128)          # keep the output >=128 lanes wide
        w_big = np.zeros((self.lookback_horizon, M_pad), np.float32)
        b_big = np.zeros((1, M_pad), np.float32)
        tok = 0
        for i, _ in enumerate(self.partitions):
            lengths = self.split_lengths[i]
            max_len = int(np.max(lengths))
            start = 0
            for s, l in enumerate(lengths):
                col = tok * self.d_model
                if self.shared:
                    w = np.asarray(self.weights[i])            # [max_len, D]
                    b = np.asarray(self.biases[i])
                    pad = max_len - l                          # left zero-pad
                    w_big[start:start + l, col:col + self.d_model] = w[pad:pad + l]
                else:
                    w = np.asarray(self.weights[i][s])         # [l, D]
                    b = np.asarray(self.biases[i][s])
                    w_big[start:start + l, col:col + self.d_model] = w
                b_big[0, col:col + self.d_model] = b
                start += l
                tok += 1
        self.w_big = jnp.asarray(w_big)
        self.b_big = jnp.asarray(b_big)
        # TODO(synk): for very large T * Ttok * D the fused weight may not fit
        # VMEM; tile the K (time) axis with a reduction grid dim + f32 VMEM
        # accumulator instead of keeping the full fused weight resident.

    def __call__(self, x):
        # x: [B, C, T] -> [B, C, total_tokens, d_model]
        B, C, T = x.shape
        assert T == self.lookback_horizon
        N = B * C
        x_flat = x.reshape(N, T)                      # contiguous, no transpose
        out_flat = fused_splitters(x_flat, self.w_big, self.b_big)
        out_flat = out_flat[:, :self.out_cols]        # drop lane padding (no-op if M>=128)
        return out_flat.reshape(B, C, self.total_tokens, self.d_model)


def reference_forward(module, x):
    """Pure-JAX mirror of the PyTorch ManySplitters.forward, for verification."""
    B, C, T = x.shape
    outs = []
    for i, _ in enumerate(module.partitions):
        lengths = module.split_lengths[i]
        max_len = int(np.max(lengths))
        toks = []
        start = 0
        for s, l in enumerate(lengths):
            part = x[:, :, start:start + l]
            if module.shared:
                pad = max_len - l
                part = jnp.concatenate(
                    [jnp.zeros((B, C, pad), x.dtype), part], axis=-1)
                w, b = module.weights[i], module.biases[i]
            else:
                w, b = module.weights[i][s], module.biases[i][s]
            toks.append(jnp.einsum('bct,td->bcd', part, w) + b)
            start += l
        outs.append(jnp.stack(toks, axis=2))
    return jnp.concatenate(outs, axis=2)


if __name__ == "__main__":
    key = jax.random.PRNGKey(0)
    d_model = 32
    lookback_horizon = 16
    partitions = [1, 2, 3]        # 6 tokens; k=3 gives uneven chunks [6, 5, 5]
    B, C = 2, 4

    module = ManySplittersPallas(
        d_model, lookback_horizon, partitions, shared=True,
        key=jax.random.fold_in(key, 123))
    x = jax.random.normal(
        jax.random.fold_in(key, 7), (B, C, lookback_horizon), jnp.float32)

    out = jax.block_until_ready(module(x))
    assert out.shape == (B, C, sum(partitions), d_model), out.shape

    ref = reference_forward(module, x)
    np.testing.assert_allclose(np.asarray(out), np.asarray(ref),
                               rtol=1e-5, atol=1e-5)
    print("KERNEL_OK")
</pallas_src>

<mosaic_0001>
module attributes {stable_mosaic.version = 11 : i64} {
  func.func @_fused_splitters_kernel(%arg0: i32, %arg1: memref<8x16xf32, #tpu.memory_space<vmem>>, %arg2: memref<16x192xf32, #tpu.memory_space<vmem>>, %arg3: memref<1x192xf32, #tpu.memory_space<vmem>>, %arg4: memref<8x192xf32, #tpu.memory_space<vmem>>) attributes {dimension_semantics = [#tpu.dimension_semantics<parallel>], iteration_bounds = array<i64: 1>, scalar_prefetch = 0 : i64, scratch_operands = 0 : i64, tpu.core_type = #tpu.core_type<tc>, window_params = [{transform_indices = @transform_0, window_bounds = array<i64: 8, 16>}, {pipeline_mode = #tpu.pipeline_mode<synchronous>, transform_indices = @transform_1, window_bounds = array<i64: 16, 192>}, {pipeline_mode = #tpu.pipeline_mode<synchronous>, transform_indices = @transform_2, window_bounds = array<i64: 1, 192>}, {transform_indices = @transform_3, window_bounds = array<i64: 8, 192>}]} {
    %c0 = arith.constant 0 : index
    %c0_0 = arith.constant 0 : index
    %0 = vector.load %arg1[%c0, %c0_0] : memref<8x16xf32, #tpu.memory_space<vmem>>, vector<8x16xf32>
    %c0_1 = arith.constant 0 : index
    %c0_2 = arith.constant 0 : index
    %1 = vector.load %arg2[%c0_1, %c0_2] : memref<16x192xf32, #tpu.memory_space<vmem>>, vector<16x192xf32>
    %cst = arith.constant dense<0.000000e+00> : vector<8x192xf32>
    %2 = tpu.matmul %0, %1, %cst {dimension_numbers = #tpu.dot_dimension_numbers<[1], [0], [0], [1], [0, 0, 1, 1], [], []>} : vector<8x16xf32>, vector<16x192xf32>, vector<8x192xf32> -> vector<8x192xf32>
    %c0_3 = arith.constant 0 : index
    %c0_4 = arith.constant 0 : index
    %3 = vector.load %arg3[%c0_3, %c0_4] : memref<1x192xf32, #tpu.memory_space<vmem>>, vector<1x192xf32>
    %4 = vector.broadcast %3 : vector<1x192xf32> to vector<8x192xf32>
    %5 = arith.addf %2, %4 : vector<8x192xf32>
    %c0_5 = arith.constant 0 : index
    %c0_6 = arith.constant 0 : index
    %6 = vector.load %arg4[%c0_5, %c0_6] : memref<8x192xf32, #tpu.memory_space<vmem>>, vector<8x192xf32>
    tpu.vector_store %arg4[%c0_5, %c0_6], %5 {strides = array<i32>} : memref<8x192xf32, #tpu.memory_space<vmem>>, vector<8x192xf32>,
    return
  }
  func.func @transform_0(%arg0: i32) -> (i32, i32) {
    %c0_i32 = arith.constant 0 : i32
    %c0_i32_0 = arith.constant 0 : i32
    return %arg0, %c0_i32 : i32, i32
  }
  func.func @transform_1(%arg0: i32) -> (i32, i32) {
    %c0_i32 = arith.constant 0 : i32
    %c0_i32_0 = arith.constant 0 : i32
    %c0_i32_1 = arith.constant 0 : i32
    return %c0_i32, %c0_i32_0 : i32, i32
  }
  func.func @transform_2(%arg0: i32) -> (i32, i32) {
    %c0_i32 = arith.constant 0 : i32
    %c0_i32_0 = arith.constant 0 : i32
    %c0_i32_1 = arith.constant 0 : i32
    return %c0_i32, %c0_i32_0 : i32, i32
  }
  func.func @transform_3(%arg0: i32) -> (i32, i32) {
    %c0_i32 = arith.constant 0 : i32
    %c0_i32_0 = arith.constant 0 : i32
    return %arg0, %c0_i32 : i32, i32
  }
}

</mosaic_0001>

<llo_original>
// kernel: tpu_custom_call.1
$region0: #{tpu_custom_call.1}
  #allocation0 [shape = 'u32[]', space=smem, size = 0x4, offset = 0x4, fixed_abs, tag = 'smem constant byte address 0x4 - core index']
  #allocation1 [shape = 'u32[144,128]{1,0:T(1,128)}', space=vmem, size = 0x12000, scoped, tag = 'internal scratch']
  %s0 = inlined_call_operand.hbm [shape: f32[8,16], index: 0, kind: input, shape index: {}]
  %s1 = inlined_call_operand.hbm [shape: f32[16,192], index: 1, kind: input, shape index: {}]
  %s2 = inlined_call_operand.hbm [shape: f32[1,192], index: 2, kind: input, shape index: {}]
  %s3 = inlined_call_operand.hbm [shape: f32[8,192], index: 3, kind: output, shape index: {}]
  %s4 = sld [smem:[#allocation0]]
  $region34: #{tpu_custom_call.1} parent=0
    _
  %s6 = ssub.s32 1, %s4
  %s7 = scalar_select 0, %s6, %s4
  $region1: #{tpu_custom_call.1} parent=0
    #allocation2 [shape = 'u8[4096]{0}', space=vmem, size = 0x1000, scoped, tag = 'input window, operand 0, single buffered']
    #allocation3 [shape = 's32[1]{0}', space=sflag, size = 0x4, scoped, tag = 'scoped memory for tpu_custom_call.1']
    #allocation4 [shape = 's32[1]{0}', space=sflag, size = 0x4, scoped, tag = 'scoped memory for tpu_custom_call.1']
    #allocation5 [shape = 'u8[16384]{0}', space=vmem, size = 0x4000, scoped, tag = 'input window, operand 1, single buffered']
    #allocation6 [shape = 's32[1]{0}', space=sflag, size = 0x4, scoped, tag = 'scoped memory for tpu_custom_call.1']
    #allocation7 [shape = 'u8[1024]{0}', space=vmem, size = 0x400, scoped, tag = 'input window, operand 2, single buffered']
    #allocation8 [shape = 'u8[8192]{0}', space=vmem, size = 0x2000, scoped, tag = 'output window, operand 0, single buffered']
    %8 = vsyncpa [#allocation3], 0
    %9 = vsyncpa [#allocation6], 0
    %10 = vsyncpa [#allocation4], 0
    // Predicated region
    $region2: #{tpu_custom_call.1} parent=1 // pred_check
      _
    $region3: #{tpu_custom_call.1} parent=1 // pred_check_branch
      %12 = sbr.rel (0) target = $region5
    $region4: #{tpu_custom_call.1} parent=1 // pred_region
      %s14 = ssub.s32 128, 128
      %15 = vsyncadd [#allocation3], %s14
      %s17 = sshll.u32 [#allocation2], 4
      %s18 = int_to_ptr.vmem [resolvable:$true] %s17
      %20 = dma.hbm_to_vmem [thread:$0]  %s0, 128, %s18, [#allocation3]
    $region5: #{tpu_custom_call.1} parent=1 // pred_fallthru
      _
    // Predicated region
    $region6: #{tpu_custom_call.1} parent=1 // pred_check
      _
    $region7: #{tpu_custom_call.1} parent=1 // pred_check_branch
      %22 = sbr.rel (0) target = $region9
    $region8: #{tpu_custom_call.1} parent=1 // pred_region
      %s24 = ssub.s32 512, 512
      %25 = vsyncadd [#allocation6], %s24
      %s26 = sshll.u32 [#allocation5], 4
      %s27 = int_to_ptr.vmem [resolvable:$true] %s26
      %32 = dma.hbm_to_vmem [thread:$0]  %s1, 512, %s27, [#allocation6], 256, 256, 16
    $region9: #{tpu_custom_call.1} parent=1 // pred_fallthru
      _
    // Predicated region
    $region10: #{tpu_custom_call.1} parent=1 // pred_check
      _
    $region11: #{tpu_custom_call.1} parent=1 // pred_check_branch
      %34 = sbr.rel (0) target = $region13
    $region12: #{tpu_custom_call.1} parent=1 // pred_region
      %s36 = ssub.s32 32, 32
      %37 = vsyncadd [#allocation6], %s36
      %s39 = sshll.u32 [#allocation7], 4
      %s40 = int_to_ptr.vmem [resolvable:$true] %s39
      %42 = dma.hbm_to_vmem [thread:$0]  %s2, 32, %s40, [#allocation6]
    $region13: #{tpu_custom_call.1} parent=1 // pred_fallthru
      _
    // Predicated region
    $region14: #{tpu_custom_call.1} parent=1 // pred_check
      _
    $region15: #{tpu_custom_call.1} parent=1 // pred_check_branch
      %44 = sbr.rel (0) target = $region17
    $region16: #{tpu_custom_call.1} parent=1 // pred_region
      %45 = dma.done [#allocation3], 128
    $region17: #{tpu_custom_call.1} parent=1 // pred_fallthru
      _
    // Predicated region
    $region18: #{tpu_custom_call.1} parent=1 // pred_check
      _
    $region19: #{tpu_custom_call.1} parent=1 // pred_check_branch
      %47 = sbr.rel (0) target = $region21
    $region20: #{tpu_custom_call.1} parent=1 // pred_region
      %48 = dma.done [#allocation6], 512
    $region21: #{tpu_custom_call.1} parent=1 // pred_fallthru
      _
    // Predicated region
    $region22: #{tpu_custom_call.1} parent=1 // pred_check
      _
    $region23: #{tpu_custom_call.1} parent=1 // pred_check_branch
      %50 = sbr.rel (0) target = $region25
    $region24: #{tpu_custom_call.1} parent=1 // pred_region
      %51 = dma.done [#allocation6], 32
    $region25: #{tpu_custom_call.1} parent=1 // pred_fallthru
      _
    %v52 = vld [vmem:[#allocation2] sm:$0xff]
    %v53 = vld [vmem:[#allocation5] sm:$0xff]
    %v54 = vld [vmem:[#allocation5 + $0x8] sm:$0xff]
    %v55 = vld [vmem:[#allocation5 + $0x10] sm:$0xff]
    %v56 = vld [vmem:[#allocation5 + $0x18] sm:$0xff]
    %v57 = vld [vmem:[#allocation7] sm:$0x3]
    %v59 = vlaneseq
    %v60 = vshrl.u32 %v59, 7
    %v61 = vsub.s32 0, %v60
    %v62 = vrot.slane %v57, %v61
    %v63 = vlaneseq
    %v64 = vshrl.u32 %v63, 7
    %v65 = vsub.s32 1, %v64
    %v66 = vrot.slane %v57, %v65
    %vm69 = vcmask 130048
    %v71 = vsel %vm69, %v52, 0
    %73 = vmatprep.subr.mxu0 %v54
    %74 = vmatpush1.msra.mxu0 %v53
    %75 = vmatprep.subr.mxu0 %v56
    %76 = vmatpush1.msra.mxu0 %v55
    %77 = vmatprep.subr.mxu0 0.0
    %78 = vmatpush1.msra.mxu0 0.0
    %79 = vmatprep.subr.mxu0 0.0
    %80 = vmatpush1.msra.mxu0 0.0
    %81 = vmatprep.subr.mxu0 0.0
    %82 = vmatpush1.msra.mxu0 0.0
    %83 = vmatprep.subr.mxu0 0.0
    %84 = vmatpush1.msra.mxu0 0.0
    %85 = vmatprep.subr.mxu0 0.0
    %86 = vmatpush1.msra.mxu0 0.0
    %87 = vmatprep.subr.mxu0 0.0
    %88 = vmatpush1.msra.mxu0 0.0
    %89 = vmatprep.subr.mxu0 0.0
    %90 = vmatpush1.msra.mxu0 0.0
    %91 = vmatprep.subr.mxu0 0.0
    %92 = vmatpush1.msra.mxu0 0.0
    %93 = vmatprep.subr.mxu0 0.0
    %94 = vmatpush1.msra.mxu0 0.0
    %95 = vmatprep.subr.mxu0 0.0
    %96 = vmatpush1.msra.mxu0 0.0
    %97 = vmatprep.subr.mxu0 0.0
    %98 = vmatpush1.msra.mxu0 0.0
    %99 = vmatprep.subr.mxu0 0.0
    %100 = vmatpush1.msra.mxu0 0.0
    %101 = vmatprep.subr.mxu0 0.0
    %102 = vmatpush1.msra.mxu0 0.0
    %103 = vmatprep.subr.mxu0 0.0
    %104 = vmatpush1.msra.mxu0 0.0
    %105 = vmatprep.subr.mxu0 0.0
    %106 = vmatpush1.msra.mxu0 0.0
    %107 = vmatprep.subr.mxu0 0.0
    %108 = vmatpush1.msra.mxu0 0.0
    %109 = vmatprep.subr.mxu0 0.0
    %110 = vmatpush1.msra.mxu0 0.0
    %111 = vmatprep.subr.mxu0 0.0
    %112 = vmatpush1.msra.mxu0 0.0
    %113 = vmatprep.subr.mxu0 0.0
    %114 = vmatpush1.msra.mxu0 0.0
    %115 = vmatprep.subr.mxu0 0.0
    %116 = vmatpush1.msra.mxu0 0.0
    %117 = vmatprep.subr.mxu0 0.0
    %118 = vmatpush1.msra.mxu0 0.0
    %119 = vmatprep.subr.mxu0 0.0
    %120 = vmatpush1.msra.mxu0 0.0
    %121 = vmatprep.subr.mxu0 0.0
    %122 = vmatpush1.msra.mxu0 0.0
    %123 = vmatprep.subr.mxu0 0.0
    %124 = vmatpush1.msra.mxu0 0.0
    %125 = vmatprep.subr.mxu0 0.0
    %126 = vmatpush1.msra.mxu0 0.0
    %127 = vmatprep.subr.mxu0 0.0
    %128 = vmatpush1.msra.mxu0 0.0
    %129 = vmatprep.subr.mxu0 0.0
    %130 = vmatpush1.msra.mxu0 0.0
    %131 = vmatprep.subr.mxu0 0.0
    %132 = vmatpush1.msra.mxu0 0.0
    %133 = vmatprep.subr.mxu0 0.0
    %134 = vmatpush1.msra.mxu0 0.0
    %135 = vmatprep.subr.mxu0 0.0
    %136 = vmatpush1.msra.mxu0 0.0
    %137 = vmatprep.mubr.f32.mxu0 0.0
    %138 = vmatmul.mubr.f32.gmra.mrb[0].mxu0 %v71
    %v139 = vpop.f32.mrb[0].mxu0
    %v140 = vadd.f32 %v62, %v139
    %v141 = vpop.f32.mrb[0].mxu0
    %v142 = vadd.f32 %v66, %v141
    %143 = vdwg.mxu0
    %144 = vst [vmem:[#allocation8] sm:$0xff] %v140
    %vm145 = vcmask 523264
    %146 = vst.msk [vmem:[#allocation8 + $0x8] sm:$0xff] %vm145, %v142
    // Predicated region
    $region26: #{tpu_custom_call.1} parent=1 // pred_check
      _
    $region27: #{tpu_custom_call.1} parent=1 // pred_check_branch
      %148 = sbr.rel (0) target = $region29
    $region28: #{tpu_custom_call.1} parent=1 // pred_region
      %s150 = ssub.s32 256, 256
      %151 = vsyncadd [#allocation4], %s150
      %s153 = sshll.u32 [#allocation8], 4
      %s154 = int_to_ptr.vmem [resolvable:$true] %s153
      %156 = dma.vmem_to_hbm [thread:$0]  %s154, 256, %s3, [#allocation4]
    $region29: #{tpu_custom_call.1} parent=1 // pred_fallthru
      _
    // Predicated region
    $region30: #{tpu_custom_call.1} parent=1 // pred_check
      _
    $region31: #{tpu_custom_call.1} parent=1 // pred_check_branch
      %158 = sbr.rel (0) target = $region33
    $region32: #{tpu_custom_call.1} parent=1 // pred_region
      %159 = dma.done [#allocation4], 256
    $region33: #{tpu_custom_call.1} parent=1 // pred_fallthru
      _
    %160 = vsyncpa [#allocation3], 1
    %161 = vsyncpa [#allocation6], 1
    %162 = vsyncpa [#allocation4], 1

</llo_original>
